<compile_context>
chip_gen: v5e
topology: v5e:2x2
jax: 0.10.0
libtpu: 0.0.40
codegen_flags: <defaults>
</compile_context>

<pallas_src>
import jax
import jax.numpy as jnp
from jax.experimental import pallas as pl
from jax.experimental.pallas import tpu as pltpu


def _conv_out(size, k, stride, padding, dilation):
    return (size + 2 * padding - dilation * (k - 1) - 1) // stride + 1


# ---------------------------------------------------------------------------
# Wrapper-side weight folding (pure functions of the parameters, built once).
# ---------------------------------------------------------------------------
def _build_conv_mats(w_dw, w_pw, *, k, stride, dilation, Wseg_in, Wo,
                     Wseg_out, out_off):
    """Fold one SepConv's depthwise (C_in,k,k) + pointwise (C_in,C_out) weights
    into k per-row-tap GEMM matrices acting on the lane-flattened layout:

      M[i][c*Wseg_in + q, co*Wseg_out + out_off + wo]
          = sum_j w_dw[c,i,j] * w_pw[c,co] * [q == wo*stride + j*dilation]
    """
    C_in_, C_out_ = w_pw.shape
    q = jnp.arange(Wseg_in)
    wo = jnp.arange(Wo)
    mats = []
    for i in range(k):
        m = jnp.zeros((C_in_, Wseg_in, C_out_, Wseg_out), jnp.float32)
        for j in range(k):
            sel = (q[:, None] == (wo[None, :] * stride + j * dilation))
            sel = sel.astype(jnp.float32)                        # (Wseg_in, Wo)
            cc = w_dw[:, i, j][:, None] * w_pw                   # (C_in, C_out)
            blk = cc[:, None, :, None] * sel[None, :, None, :]
            m = m.at[:, :, :, out_off:out_off + Wo].add(blk)
        mats.append(m.reshape(C_in_ * Wseg_in, C_out_ * Wseg_out))
    return jnp.stack(mats)              # (k, C_in*Wseg_in, C_out*Wseg_out)


def _build_bn_consts(gamma, beta, *, Wseg, off, Wvalid):
    """Segmented-sum+broadcast matrix S and per-lane gamma/beta vectors for a
    lane layout of `C` segments of width Wseg (valid lanes [off, off+Wvalid))."""
    C = gamma.shape[0]
    lane = jnp.arange(C * Wseg)
    ch, pos = lane // Wseg, lane % Wseg
    valid = (pos >= off) & (pos < off + Wvalid)
    S = ((ch[:, None] == ch[None, :]) & valid[:, None]
         & valid[None, :]).astype(jnp.float32)                   # (L, L)
    gvec = jnp.where(valid, gamma[ch], 0.0)
    bvec = jnp.where(valid, beta[ch], 0.0)
    return S, jnp.stack([gvec, bvec]).astype(jnp.float32)        # (2, L)


# ---------------------------------------------------------------------------
# Kernel
# ---------------------------------------------------------------------------
def _make_kernel(N, C_in, C_out, H, W, k, stride, padding, dilation, eps):
    p, d, s = padding, dilation, stride
    Ho1, Wo1 = _conv_out(H, k, s, p, d), _conv_out(W, k, s, p, d)
    Ho2, Wo2 = _conv_out(Ho1, k, 1, p, d), _conv_out(Wo1, k, 1, p, d)
    WpA, WpB = W + 2 * p, Wo1 + 2 * p
    HpA, HpB = H + 2 * p, Ho1 + 2 * p
    LA, LB, LO = C_in * WpA, C_in * WpB, C_out * Wo2

    def conv_gemm(xpad, m_ref, Ho, s_):
        """k accumulated MXU GEMMs == depthwise + 1x1 conv of one SepConv."""
        y = None
        for i in range(k):
            if s_ == 1:
                band = xpad[:, i * d:i * d + Ho, :]
            else:
                # TODO(synk): stride>1 row path uses a strided sublane slice;
                #             functional but not perf-tuned (demo uses s=1).
                band = xpad[:, i * d:i * d + (Ho - 1) * s_ + 1:s_, :]
            t = jnp.dot(band.reshape(N * Ho, xpad.shape[-1]), m_ref[i],
                        preferred_element_type=jnp.float32)
            y = t if y is None else y + t
        return y                                   # (N*Ho, L_out)

    def batchnorm(y, s_ref, gb_ref, count):
        """Training-mode BN, batched across channels, two-pass variance."""
        inv = 1.0 / float(count)
        # Per-lane partial sums (one sublane reduce for ALL channels), then one
        # small GEMM does the per-channel segmented reduce + lane broadcast.
        mean = jnp.dot(jnp.sum(y, axis=0, keepdims=True), s_ref[...],
                       preferred_element_type=jnp.float32) * inv
        yc = y - mean
        var = jnp.dot(jnp.sum(yc * yc, axis=0, keepdims=True), s_ref[...],
                      preferred_element_type=jnp.float32) * inv
        scale = gb_ref[0:1, :] * jax.lax.rsqrt(var + eps)        # EUP rsqrt
        shift = gb_ref[1:2, :] - mean * scale
        return y * scale + shift      # single FMA; exactly 0 on pad lanes

    def kernel(x_ref, mA_ref, sA_ref, gbA_ref, mB_ref, sB_ref, gbB_ref,
               out_ref, padA_ref, padB_ref):
        # ---- stage A input relayout: NCHW -> (N, HpA, C_in*WpA), ReLU fused.
        # Only the interior is written (C_in tiny stores); the halo rows / pad
        # columns are never zero-filled -- they are masked at load with a
        # NaN-safe select, so nothing is written twice.
        for c in range(C_in):
            padA_ref[:, p:p + H, c * WpA + p:c * WpA + p + W] = jnp.maximum(
                x_ref[:, c, :, :], 0.0)
        rowA = jax.lax.broadcasted_iota(jnp.int32, (1, HpA, LA), 1)
        colA = jax.lax.broadcasted_iota(jnp.int32, (1, HpA, LA), 2) % WpA
        okA = ((rowA >= p) & (rowA < p + H) & (colA >= p) & (colA < p + W))
        xA = jnp.where(okA, padA_ref[...], 0.0)              # (N, HpA, LA)

        # ---- SepConv A: conv pair on the MXU, then BN -----------------------
        yA = conv_gemm(xA, mA_ref, Ho1, s)                    # (N*Ho1, LB)
        yA = batchnorm(yA, sA_ref, gbA_ref, N * Ho1 * Wo1)

        # ---- stage B input: the GEMM above already emitted stage B's padded
        # lane layout with pad columns == 0, so only the row halo needs masking.
        padB_ref[:, p:p + Ho1, :] = jnp.maximum(yA, 0.0).reshape(N, Ho1, LB)
        rowB = jax.lax.broadcasted_iota(jnp.int32, (1, HpB, LB), 1)
        okB = (rowB >= p) & (rowB < p + Ho1)
        xB = jnp.where(okB, padB_ref[...], 0.0)               # (N, HpB, LB)

        # ---- SepConv B ------------------------------------------------------
        yB = conv_gemm(xB, mB_ref, Ho2, 1)                    # (N*Ho2, LO)
        yB = batchnorm(yB, sB_ref, gbB_ref, N * Ho2 * Wo2)

        # ---- single lane-dense output store (last dim = C_out*Wo2 = 128 here)
        out_ref[...] = yB.reshape(N, Ho2, LO)

    dims = dict(Ho1=Ho1, Wo1=Wo1, Ho2=Ho2, Wo2=Wo2, WpA=WpA, WpB=WpB,
                HpA=HpA, HpB=HpB, LA=LA, LB=LB, LO=LO)
    return kernel, dims


# ---------------------------------------------------------------------------
# Public wrapper
# ---------------------------------------------------------------------------
def dual_sep_conv(x_nchw, params, *, kernel_size, stride, padding, dilation,
                  eps=1e-5):
    """DualSepConv forward.  x_nchw: (N, C_in, H, W) -> (N, C_out, Ho, Wo)."""
    N, C_in, H, W = x_nchw.shape
    pa, pb = params["op_a"], params["op_b"]
    C_out = pb["w_pw"].shape[1]
    k, p, d = kernel_size, padding, dilation

    kernel, dm = _make_kernel(N, C_in, C_out, H, W, k, stride, p, d, eps)
    Ho1, Wo1, Ho2, Wo2 = dm["Ho1"], dm["Wo1"], dm["Ho2"], dm["Wo2"]
    LA, LB, LO = dm["LA"], dm["LB"], dm["LO"]

    # Fold each (depthwise, 1x1) weight pair into k per-row-tap GEMM matrices.
    mA = _build_conv_mats(pa["w_dw"], pa["w_pw"], k=k, stride=stride,
                          dilation=d, Wseg_in=dm["WpA"], Wo=Wo1,
                          Wseg_out=dm["WpB"], out_off=p)
    mB = _build_conv_mats(pb["w_dw"], pb["w_pw"], k=k, stride=1,
                          dilation=d, Wseg_in=dm["WpB"], Wo=Wo2,
                          Wseg_out=Wo2, out_off=0)
    sA, gbA = _build_bn_consts(pa["gamma"], pa["beta"], Wseg=dm["WpB"],
                               off=p, Wvalid=Wo1)
    sB, gbB = _build_bn_consts(pb["gamma"], pb["beta"], Wseg=Wo2,
                               off=0, Wvalid=Wo2)

    vmem = pl.BlockSpec(memory_space=pltpu.MemorySpace.VMEM)

    flops = 2 * k * N * (Ho1 * LA * LB + Ho2 * LB * LO) \
        + 8 * N * (Ho1 * LB + Ho2 * LO)
    bytes_accessed = 4 * (x_nchw.size + N * Ho2 * LO + mA.size + mB.size
                          + sA.size + sB.size + gbA.size + gbB.size)

    out = pl.pallas_call(
        kernel,
        out_shape=jax.ShapeDtypeStruct((N, Ho2, LO), jnp.float32),
        in_specs=[vmem] * 7,
        out_specs=vmem,
        scratch_shapes=[
            pltpu.VMEM((N, dm["HpA"], LA), jnp.float32),  # stage-A padded input
            pltpu.VMEM((N, dm["HpB"], LB), jnp.float32),  # stage-B padded input
        ],
        compiler_params=pltpu.CompilerParams(
            vmem_limit_bytes=32 * 1024 * 1024),
        cost_estimate=pl.CostEstimate(flops=flops,
                                      transcendentals=LB + LO,
                                      bytes_accessed=bytes_accessed),
    )(x_nchw.astype(jnp.float32), mA, sA, gbA, mB, sB, gbB)

    # (N, Ho2, C_out*Wo2) lane-dense slab -> NCHW for the caller.
    # TODO(synk): fold into the consumer / DMA-scatter from the kernel instead.
    return jnp.transpose(out.reshape(N, Ho2, C_out, Wo2), (0, 2, 1, 3))


# ---------------------------------------------------------------------------
# Parameters + pure-JAX reference (for checking)
# ---------------------------------------------------------------------------
def init_params(key, C_in, C_out, kernel_size):
    """affine=True => 1x1 conv has no bias, BN has gamma=1 / beta=0.
    w_dw layout: (C, kh, kw) (== PyTorch (C,1,kh,kw) squeezed);
    w_pw layout: (C_in, C_out) (== PyTorch (C_out, C_in, 1, 1) transposed)."""
    ks = jax.random.split(key, 4)

    def sep(kd, kp_, c_in, c_out):
        return dict(
            w_dw=0.1 * jax.random.normal(kd, (c_in, kernel_size, kernel_size),
                                         jnp.float32),
            w_pw=0.1 * jax.random.normal(kp_, (c_in, c_out), jnp.float32),
            gamma=jnp.ones((c_out,), jnp.float32),
            beta=jnp.zeros((c_out,), jnp.float32),
        )

    return dict(op_a=sep(ks[0], ks[1], C_in, C_in),
                op_b=sep(ks[2], ks[3], C_in, C_out))


def _sepconv_ref(x, prm, *, stride, padding, dilation, eps=1e-5):
    x = jnp.maximum(x, 0.0)
    C_in = x.shape[1]
    w_dw = prm["w_dw"][:, None, :, :]                       # (C,1,kh,kw) OIHW
    y = jax.lax.conv_general_dilated(
        x, w_dw, (stride, stride),
        ((padding, padding), (padding, padding)),
        rhs_dilation=(dilation, dilation),
        dimension_numbers=("NCHW", "OIHW", "NCHW"),
        feature_group_count=C_in,
        precision=jax.lax.Precision.HIGHEST)
    w_pw = jnp.transpose(prm["w_pw"])[:, :, None, None]     # (C_out,C_in,1,1)
    y = jax.lax.conv_general_dilated(
        y, w_pw, (1, 1), ((0, 0), (0, 0)),
        dimension_numbers=("NCHW", "OIHW", "NCHW"),
        precision=jax.lax.Precision.HIGHEST)
    m = jnp.mean(y, axis=(0, 2, 3), keepdims=True)
    v = jnp.var(y, axis=(0, 2, 3), keepdims=True)           # biased var
    y = (y - m) * jax.lax.rsqrt(v + eps)
    return (y * prm["gamma"][None, :, None, None]
            + prm["beta"][None, :, None, None])


def _dual_ref(x, params, *, kernel_size, stride, padding, dilation):
    y = _sepconv_ref(x, params["op_a"], stride=stride, padding=padding,
                     dilation=dilation)
    return _sepconv_ref(y, params["op_b"], stride=1, padding=padding,
                        dilation=dilation)


if __name__ == "__main__":
    key = jax.random.PRNGKey(0)
    kx, kp = jax.random.split(key)

    N, C_in, H, W = 2, 4, 16, 16
    C_out = 8
    kernel_size, stride, padding, dilation = 3, 1, 1, 1  # affine=True

    x = jax.random.normal(kx, (N, C_in, H, W), jnp.float32)
    params = init_params(kp, C_in, C_out, kernel_size)

    out = dual_sep_conv(x, params, kernel_size=kernel_size, stride=stride,
                        padding=padding, dilation=dilation)
    out = jax.block_until_ready(out)
    assert out.shape == (N, C_out, H, W), out.shape

    ref = _dual_ref(x, params, kernel_size=kernel_size, stride=stride,
                    padding=padding, dilation=dilation)
    # Tolerance accounts for MXU f32 accumulation-order differences vs the
    # HIGHEST-precision XLA conv reference (output is BN-normalized, unit scale).
    err = float(jnp.max(jnp.abs(out - ref)))
    assert jnp.allclose(out, ref, atol=5e-3, rtol=5e-3), err

    print("KERNEL_OK")
</pallas_src>

<mosaic_0001>
module attributes {stable_mosaic.version = 11 : i64} {
  func.func @kernel(%arg0: memref<2x4x16x16xf32, #tpu.memory_space<vmem>>, %arg1: memref<3x72x72xf32, #tpu.memory_space<vmem>>, %arg2: memref<72x72xf32, #tpu.memory_space<vmem>>, %arg3: memref<2x72xf32, #tpu.memory_space<vmem>>, %arg4: memref<3x72x128xf32, #tpu.memory_space<vmem>>, %arg5: memref<128x128xf32, #tpu.memory_space<vmem>>, %arg6: memref<2x128xf32, #tpu.memory_space<vmem>>, %arg7: memref<2x16x128xf32, #tpu.memory_space<vmem>>, %arg8: memref<2x18x72xf32, #tpu.memory_space<vmem>>, %arg9: memref<2x18x72xf32, #tpu.memory_space<vmem>>) attributes {dimension_semantics = [], scalar_prefetch = 0 : i64, scratch_operands = 2 : i64, tpu.core_type = #tpu.core_type<tc>} {
    %c0 = arith.constant 0 : index
    %c0_0 = arith.constant 0 : index
    %c0_1 = arith.constant 0 : index
    %c0_2 = arith.constant 0 : index
    %0 = vector.load %arg0[%c0, %c0_0, %c0_1, %c0_2] : memref<2x4x16x16xf32, #tpu.memory_space<vmem>>, vector<2x1x16x16xf32>
    %1 = vector.shape_cast %0 : vector<2x1x16x16xf32> to vector<2x16x16xf32>
    %cst = arith.constant 0.000000e+00 : f32
    %2 = vector.broadcast %cst : f32 to vector<2x16x16xf32>
    %3 = arith.maximumf %1, %2 : vector<2x16x16xf32>
    %c0_3 = arith.constant 0 : index
    %c1 = arith.constant 1 : index
    %c1_4 = arith.constant 1 : index
    %4 = vector.load %arg8[%c0_3, %c1, %c1_4] : memref<2x18x72xf32, #tpu.memory_space<vmem>>, vector<2x16x16xf32>
    tpu.vector_store %arg8[%c0_3, %c1, %c1_4], %3 {strides = array<i32>} : memref<2x18x72xf32, #tpu.memory_space<vmem>>, vector<2x16x16xf32>,
    %c0_5 = arith.constant 0 : index
    %c1_6 = arith.constant 1 : index
    %c0_7 = arith.constant 0 : index
    %c0_8 = arith.constant 0 : index
    %5 = vector.load %arg0[%c0_5, %c1_6, %c0_7, %c0_8] : memref<2x4x16x16xf32, #tpu.memory_space<vmem>>, vector<2x1x16x16xf32>
    %6 = vector.shape_cast %5 : vector<2x1x16x16xf32> to vector<2x16x16xf32>
    %cst_9 = arith.constant 0.000000e+00 : f32
    %7 = vector.broadcast %cst_9 : f32 to vector<2x16x16xf32>
    %8 = arith.maximumf %6, %7 : vector<2x16x16xf32>
    %c0_10 = arith.constant 0 : index
    %c1_11 = arith.constant 1 : index
    %c19 = arith.constant 19 : index
    %9 = vector.load %arg8[%c0_10, %c1_11, %c19] : memref<2x18x72xf32, #tpu.memory_space<vmem>>, vector<2x16x16xf32>
    tpu.vector_store %arg8[%c0_10, %c1_11, %c19], %8 {strides = array<i32>} : memref<2x18x72xf32, #tpu.memory_space<vmem>>, vector<2x16x16xf32>,
    %c0_12 = arith.constant 0 : index
    %c2 = arith.constant 2 : index
    %c0_13 = arith.constant 0 : index
    %c0_14 = arith.constant 0 : index
    %10 = vector.load %arg0[%c0_12, %c2, %c0_13, %c0_14] : memref<2x4x16x16xf32, #tpu.memory_space<vmem>>, vector<2x1x16x16xf32>
    %11 = vector.shape_cast %10 : vector<2x1x16x16xf32> to vector<2x16x16xf32>
    %cst_15 = arith.constant 0.000000e+00 : f32
    %12 = vector.broadcast %cst_15 : f32 to vector<2x16x16xf32>
    %13 = arith.maximumf %11, %12 : vector<2x16x16xf32>
    %c0_16 = arith.constant 0 : index
    %c1_17 = arith.constant 1 : index
    %c37 = arith.constant 37 : index
    %14 = vector.load %arg8[%c0_16, %c1_17, %c37] : memref<2x18x72xf32, #tpu.memory_space<vmem>>, vector<2x16x16xf32>
    tpu.vector_store %arg8[%c0_16, %c1_17, %c37], %13 {strides = array<i32>} : memref<2x18x72xf32, #tpu.memory_space<vmem>>, vector<2x16x16xf32>,
    %c0_18 = arith.constant 0 : index
    %c3 = arith.constant 3 : index
    %c0_19 = arith.constant 0 : index
    %c0_20 = arith.constant 0 : index
    %15 = vector.load %arg0[%c0_18, %c3, %c0_19, %c0_20] : memref<2x4x16x16xf32, #tpu.memory_space<vmem>>, vector<2x1x16x16xf32>
    %16 = vector.shape_cast %15 : vector<2x1x16x16xf32> to vector<2x16x16xf32>
    %cst_21 = arith.constant 0.000000e+00 : f32
    %17 = vector.broadcast %cst_21 : f32 to vector<2x16x16xf32>
    %18 = arith.maximumf %16, %17 : vector<2x16x16xf32>
    %c0_22 = arith.constant 0 : index
    %c1_23 = arith.constant 1 : index
    %c55 = arith.constant 55 : index
    %19 = vector.load %arg8[%c0_22, %c1_23, %c55] : memref<2x18x72xf32, #tpu.memory_space<vmem>>, vector<2x16x16xf32>
    tpu.vector_store %arg8[%c0_22, %c1_23, %c55], %18 {strides = array<i32>} : memref<2x18x72xf32, #tpu.memory_space<vmem>>, vector<2x16x16xf32>,
    %20 = tpu.iota {dimensions = array<i32: 1>} : vector<1x18x72xi32>
    %21 = tpu.iota {dimensions = array<i32: 2>} : vector<1x18x72xi32>
    %c18_i32 = arith.constant 18 : i32
    %c0_i32 = arith.constant 0 : i32
    %22 = arith.cmpi eq, %c18_i32, %c0_i32 : i32
    %c1_i32 = arith.constant 1 : i32
    %23 = arith.select %22, %c1_i32, %c18_i32 : i32
    %24 = vector.broadcast %23 : i32 to vector<1x18x72xi32>
    %25 = arith.remsi %21, %24 : vector<1x18x72xi32>
    %c0_i32_24 = arith.constant 0 : i32
    %26 = vector.broadcast %c0_i32_24 : i32 to vector<1x18x72xi32>
    %27 = arith.cmpi ne, %25, %26 : vector<1x18x72xi32>
    %c0_i32_25 = arith.constant 0 : i32
    %28 = vector.broadcast %c0_i32_25 : i32 to vector<1x18x72xi32>
    %29 = arith.cmpi slt, %25, %28 : vector<1x18x72xi32>
    %c0_i32_26 = arith.constant 0 : i32
    %30 = arith.cmpi slt, %23, %c0_i32_26 : i32
    %31 = vector.broadcast %30 : i1 to vector<1x18x72xi1>
    %32 = vector.broadcast %31 : vector<1x18x72xi1> to vector<1x18x72xi1>
    %33 = arith.xori %29, %32 : vector<1x18x72xi1>
    %34 = arith.andi %33, %27 : vector<1x18x72xi1>
    %35 = vector.broadcast %23 : i32 to vector<1x18x72xi32>
    %36 = arith.addi %25, %35 : vector<1x18x72xi32>
    %37 = arith.select %34, %36, %25 : vector<1x18x72xi1>, vector<1x18x72xi32>
    %c1_i32_27 = arith.constant 1 : i32
    %38 = vector.broadcast %c1_i32_27 : i32 to vector<1x18x72xi32>
    %39 = arith.cmpi sge, %20, %38 : vector<1x18x72xi32>
    %c17_i32 = arith.constant 17 : i32
    %40 = vector.broadcast %c17_i32 : i32 to vector<1x18x72xi32>
    %41 = arith.cmpi slt, %20, %40 : vector<1x18x72xi32>
    %42 = arith.andi %39, %41 : vector<1x18x72xi1>
    %c1_i32_28 = arith.constant 1 : i32
    %43 = vector.broadcast %c1_i32_28 : i32 to vector<1x18x72xi32>
    %44 = arith.cmpi sge, %37, %43 : vector<1x18x72xi32>
    %45 = arith.andi %42, %44 : vector<1x18x72xi1>
    %c17_i32_29 = arith.constant 17 : i32
    %46 = vector.broadcast %c17_i32_29 : i32 to vector<1x18x72xi32>
    %47 = arith.cmpi slt, %37, %46 : vector<1x18x72xi32>
    %48 = arith.andi %45, %47 : vector<1x18x72xi1>
    %c0_30 = arith.constant 0 : index
    %c0_31 = arith.constant 0 : index
    %c0_32 = arith.constant 0 : index
    %49 = vector.load %arg8[%c0_30, %c0_31, %c0_32] : memref<2x18x72xf32, #tpu.memory_space<vmem>>, vector<2x18x72xf32>
    %cst_33 = arith.constant 0.000000e+00 : f32
    %50 = vector.shape_cast %48 : vector<1x18x72xi1> to vector<1x18x72xi1>
    %51 = vector.broadcast %50 : vector<1x18x72xi1> to vector<2x18x72xi1>
    %52 = vector.broadcast %cst_33 : f32 to vector<2x18x72xf32>
    %53 = arith.select %51, %49, %52 : vector<2x18x72xi1>, vector<2x18x72xf32>
    %54 = vector.extract_strided_slice %53 {offsets = [0, 0, 0], sizes = [2, 16, 72], strides = [1, 1, 1]} : vector<2x18x72xf32> to vector<2x16x72xf32>
    %55 = vector.shape_cast %54 : vector<2x16x72xf32> to vector<32x72xf32>
    %c0_34 = arith.constant 0 : index
    %c0_35 = arith.constant 0 : index
    %c0_36 = arith.constant 0 : index
    %56 = vector.load %arg1[%c0_34, %c0_35, %c0_36] : memref<3x72x72xf32, #tpu.memory_space<vmem>>, vector<1x72x72xf32>
    %57 = vector.shape_cast %56 : vector<1x72x72xf32> to vector<72x72xf32>
    %cst_37 = arith.constant dense<0.000000e+00> : vector<32x72xf32>
    %58 = tpu.matmul %55, %57, %cst_37 {dimension_numbers = #tpu.dot_dimension_numbers<[1], [0], [0], [1], [0, 0, 1, 1], [], []>} : vector<32x72xf32>, vector<72x72xf32>, vector<32x72xf32> -> vector<32x72xf32>
    %59 = vector.extract_strided_slice %53 {offsets = [0, 1, 0], sizes = [2, 16, 72], strides = [1, 1, 1]} : vector<2x18x72xf32> to vector<2x16x72xf32>
    %60 = vector.shape_cast %59 : vector<2x16x72xf32> to vector<32x72xf32>
    %c1_38 = arith.constant 1 : index
    %c0_39 = arith.constant 0 : index
    %c0_40 = arith.constant 0 : index
    %61 = vector.load %arg1[%c1_38, %c0_39, %c0_40] : memref<3x72x72xf32, #tpu.memory_space<vmem>>, vector<1x72x72xf32>
    %62 = vector.shape_cast %61 : vector<1x72x72xf32> to vector<72x72xf32>
    %cst_41 = arith.constant dense<0.000000e+00> : vector<32x72xf32>
    %63 = tpu.matmul %60, %62, %cst_41 {dimension_numbers = #tpu.dot_dimension_numbers<[1], [0], [0], [1], [0, 0, 1, 1], [], []>} : vector<32x72xf32>, vector<72x72xf32>, vector<32x72xf32> -> vector<32x72xf32>
    %64 = arith.addf %58, %63 : vector<32x72xf32>
    %65 = vector.extract_strided_slice %53 {offsets = [0, 2, 0], sizes = [2, 16, 72], strides = [1, 1, 1]} : vector<2x18x72xf32> to vector<2x16x72xf32>
    %66 = vector.shape_cast %65 : vector<2x16x72xf32> to vector<32x72xf32>
    %c2_42 = arith.constant 2 : index
    %c0_43 = arith.constant 0 : index
    %c0_44 = arith.constant 0 : index
    %67 = vector.load %arg1[%c2_42, %c0_43, %c0_44] : memref<3x72x72xf32, #tpu.memory_space<vmem>>, vector<1x72x72xf32>
    %68 = vector.shape_cast %67 : vector<1x72x72xf32> to vector<72x72xf32>
    %cst_45 = arith.constant dense<0.000000e+00> : vector<32x72xf32>
    %69 = tpu.matmul %66, %68, %cst_45 {dimension_numbers = #tpu.dot_dimension_numbers<[1], [0], [0], [1], [0, 0, 1, 1], [], []>} : vector<32x72xf32>, vector<72x72xf32>, vector<32x72xf32> -> vector<32x72xf32>
    %70 = arith.addf %64, %69 : vector<32x72xf32>
    %cst_46 = arith.constant dense<0.000000e+00> : vector<72xf32>
    %71 = vector.multi_reduction <add>, %70, %cst_46 [0] : vector<32x72xf32> to vector<72xf32>
    %72 = vector.shape_cast %71 : vector<72xf32> to vector<1x72xf32>
    %c0_47 = arith.constant 0 : index
    %c0_48 = arith.constant 0 : index
    %73 = vector.load %arg2[%c0_47, %c0_48] : memref<72x72xf32, #tpu.memory_space<vmem>>, vector<72x72xf32>
    %cst_49 = arith.constant dense<0.000000e+00> : vector<1x72xf32>
    %74 = tpu.matmul %72, %73, %cst_49 {dimension_numbers = #tpu.dot_dimension_numbers<[1], [0], [0], [1], [0, 0, 1, 1], [], []>} : vector<1x72xf32>, vector<72x72xf32>, vector<1x72xf32> -> vector<1x72xf32>
    %cst_50 = arith.constant 0.001953125 : f32
    %75 = vector.broadcast %cst_50 : f32 to vector<1x72xf32>
    %76 = arith.mulf %74, %75 : vector<1x72xf32>
    %77 = vector.broadcast %76 : vector<1x72xf32> to vector<32x72xf32>
    %78 = arith.subf %70, %77 : vector<32x72xf32>
    %79 = arith.mulf %78, %78 : vector<32x72xf32>
    %cst_51 = arith.constant dense<0.000000e+00> : vector<72xf32>
    %80 = vector.multi_reduction <add>, %79, %cst_51 [0] : vector<32x72xf32> to vector<72xf32>
    %81 = vector.shape_cast %80 : vector<72xf32> to vector<1x72xf32>
    %c0_52 = arith.constant 0 : index
    %c0_53 = arith.constant 0 : index
    %82 = vector.load %arg2[%c0_52, %c0_53] : memref<72x72xf32, #tpu.memory_space<vmem>>, vector<72x72xf32>
    %cst_54 = arith.constant dense<0.000000e+00> : vector<1x72xf32>
    %83 = tpu.matmul %81, %82, %cst_54 {dimension_numbers = #tpu.dot_dimension_numbers<[1], [0], [0], [1], [0, 0, 1, 1], [], []>} : vector<1x72xf32>, vector<72x72xf32>, vector<1x72xf32> -> vector<1x72xf32>
    %cst_55 = arith.constant 0.001953125 : f32
    %84 = vector.broadcast %cst_55 : f32 to vector<1x72xf32>
    %85 = arith.mulf %83, %84 : vector<1x72xf32>
    %c0_56 = arith.constant 0 : index
    %c0_57 = arith.constant 0 : index
    %86 = vector.load %arg3[%c0_56, %c0_57] : memref<2x72xf32, #tpu.memory_space<vmem>>, vector<1x72xf32>
    %cst_58 = arith.constant 9.99999974E-6 : f32
    %87 = vector.broadcast %cst_58 : f32 to vector<1x72xf32>
    %88 = arith.addf %85, %87 : vector<1x72xf32>
    %89 = math.rsqrt %88 : vector<1x72xf32>
    %90 = arith.mulf %86, %89 : vector<1x72xf32>
    %c1_59 = arith.constant 1 : index
    %c0_60 = arith.constant 0 : index
    %91 = vector.load %arg3[%c1_59, %c0_60] : memref<2x72xf32, #tpu.memory_space<vmem>>, vector<1x72xf32>
    %92 = arith.mulf %76, %90 : vector<1x72xf32>
    %93 = arith.subf %91, %92 : vector<1x72xf32>
    %94 = vector.broadcast %90 : vector<1x72xf32> to vector<32x72xf32>
    %95 = arith.mulf %70, %94 : vector<32x72xf32>
    %96 = vector.broadcast %93 : vector<1x72xf32> to vector<32x72xf32>
    %97 = arith.addf %95, %96 : vector<32x72xf32>
    %cst_61 = arith.constant 0.000000e+00 : f32
    %98 = vector.broadcast %cst_61 : f32 to vector<32x72xf32>
    %99 = arith.maximumf %97, %98 : vector<32x72xf32>
    %100 = vector.shape_cast %99 : vector<32x72xf32> to vector<2x16x72xf32>
    %c0_62 = arith.constant 0 : index
    %c1_63 = arith.constant 1 : index
    %c0_64 = arith.constant 0 : index
    %101 = vector.load %arg9[%c0_62, %c1_63, %c0_64] : memref<2x18x72xf32, #tpu.memory_space<vmem>>, vector<2x16x72xf32>
    tpu.vector_store %arg9[%c0_62, %c1_63, %c0_64], %100 {strides = array<i32>} : memref<2x18x72xf32, #tpu.memory_space<vmem>>, vector<2x16x72xf32>,
    %102 = tpu.iota {dimensions = array<i32: 1>} : vector<1x18x72xi32>
    %c1_i32_65 = arith.constant 1 : i32
    %103 = vector.broadcast %c1_i32_65 : i32 to vector<1x18x72xi32>
    %104 = arith.cmpi sge, %102, %103 : vector<1x18x72xi32>
    %c17_i32_66 = arith.constant 17 : i32
    %105 = vector.broadcast %c17_i32_66 : i32 to vector<1x18x72xi32>
    %106 = arith.cmpi slt, %102, %105 : vector<1x18x72xi32>
    %107 = arith.andi %104, %106 : vector<1x18x72xi1>
    %c0_67 = arith.constant 0 : index
    %c0_68 = arith.constant 0 : index
    %c0_69 = arith.constant 0 : index
    %108 = vector.load %arg9[%c0_67, %c0_68, %c0_69] : memref<2x18x72xf32, #tpu.memory_space<vmem>>, vector<2x18x72xf32>
    %cst_70 = arith.constant 0.000000e+00 : f32
    %109 = vector.shape_cast %107 : vector<1x18x72xi1> to vector<1x18x72xi1>
    %110 = vector.broadcast %109 : vector<1x18x72xi1> to vector<2x18x72xi1>
    %111 = vector.broadcast %cst_70 : f32 to vector<2x18x72xf32>
    %112 = arith.select %110, %108, %111 : vector<2x18x72xi1>, vector<2x18x72xf32>
    %113 = vector.extract_strided_slice %112 {offsets = [0, 0, 0], sizes = [2, 16, 72], strides = [1, 1, 1]} : vector<2x18x72xf32> to vector<2x16x72xf32>
    %114 = vector.shape_cast %113 : vector<2x16x72xf32> to vector<32x72xf32>
    %c0_71 = arith.constant 0 : index
    %c0_72 = arith.constant 0 : index
    %c0_73 = arith.constant 0 : index
    %115 = vector.load %arg4[%c0_71, %c0_72, %c0_73] : memref<3x72x128xf32, #tpu.memory_space<vmem>>, vector<1x72x128xf32>
    %116 = vector.shape_cast %115 : vector<1x72x128xf32> to vector<72x128xf32>
    %cst_74 = arith.constant dense<0.000000e+00> : vector<32x128xf32>
    %117 = tpu.matmul %114, %116, %cst_74 {dimension_numbers = #tpu.dot_dimension_numbers<[1], [0], [0], [1], [0, 0, 1, 1], [], []>} : vector<32x72xf32>, vector<72x128xf32>, vector<32x128xf32> -> vector<32x128xf32>
    %118 = vector.extract_strided_slice %112 {offsets = [0, 1, 0], sizes = [2, 16, 72], strides = [1, 1, 1]} : vector<2x18x72xf32> to vector<2x16x72xf32>
    %119 = vector.shape_cast %118 : vector<2x16x72xf32> to vector<32x72xf32>
    %c1_75 = arith.constant 1 : index
    %c0_76 = arith.constant 0 : index
    %c0_77 = arith.constant 0 : index
    %120 = vector.load %arg4[%c1_75, %c0_76, %c0_77] : memref<3x72x128xf32, #tpu.memory_space<vmem>>, vector<1x72x128xf32>
    %121 = vector.shape_cast %120 : vector<1x72x128xf32> to vector<72x128xf32>
    %cst_78 = arith.constant dense<0.000000e+00> : vector<32x128xf32>
    %122 = tpu.matmul %119, %121, %cst_78 {dimension_numbers = #tpu.dot_dimension_numbers<[1], [0], [0], [1], [0, 0, 1, 1], [], []>} : vector<32x72xf32>, vector<72x128xf32>, vector<32x128xf32> -> vector<32x128xf32>
    %123 = arith.addf %117, %122 : vector<32x128xf32>
    %124 = vector.extract_strided_slice %112 {offsets = [0, 2, 0], sizes = [2, 16, 72], strides = [1, 1, 1]} : vector<2x18x72xf32> to vector<2x16x72xf32>
    %125 = vector.shape_cast %124 : vector<2x16x72xf32> to vector<32x72xf32>
    %c2_79 = arith.constant 2 : index
    %c0_80 = arith.constant 0 : index
    %c0_81 = arith.constant 0 : index
    %126 = vector.load %arg4[%c2_79, %c0_80, %c0_81] : memref<3x72x128xf32, #tpu.memory_space<vmem>>, vector<1x72x128xf32>
    %127 = vector.shape_cast %126 : vector<1x72x128xf32> to vector<72x128xf32>
    %cst_82 = arith.constant dense<0.000000e+00> : vector<32x128xf32>
    %128 = tpu.matmul %125, %127, %cst_82 {dimension_numbers = #tpu.dot_dimension_numbers<[1], [0], [0], [1], [0, 0, 1, 1], [], []>} : vector<32x72xf32>, vector<72x128xf32>, vector<32x128xf32> -> vector<32x128xf32>
    %129 = arith.addf %123, %128 : vector<32x128xf32>
    %cst_83 = arith.constant dense<0.000000e+00> : vector<128xf32>
    %130 = vector.multi_reduction <add>, %129, %cst_83 [0] : vector<32x128xf32> to vector<128xf32>
    %131 = vector.shape_cast %130 : vector<128xf32> to vector<1x128xf32>
    %c0_84 = arith.constant 0 : index
    %c0_85 = arith.constant 0 : index
    %132 = vector.load %arg5[%c0_84, %c0_85] : memref<128x128xf32, #tpu.memory_space<vmem>>, vector<128x128xf32>
    %cst_86 = arith.constant dense<0.000000e+00> : vector<1x128xf32>
    %133 = tpu.matmul %131, %132, %cst_86 {dimension_numbers = #tpu.dot_dimension_numbers<[1], [0], [0], [1], [0, 0, 1, 1], [], []>} : vector<1x128xf32>, vector<128x128xf32>, vector<1x128xf32> -> vector<1x128xf32>
    %cst_87 = arith.constant 0.001953125 : f32
    %134 = vector.broadcast %cst_87 : f32 to vector<1x128xf32>
    %135 = arith.mulf %133, %134 : vector<1x128xf32>
    %136 = vector.broadcast %135 : vector<1x128xf32> to vector<32x128xf32>
    %137 = arith.subf %129, %136 : vector<32x128xf32>
    %138 = arith.mulf %137, %137 : vector<32x128xf32>
    %cst_88 = arith.constant dense<0.000000e+00> : vector<128xf32>
    %139 = vector.multi_reduction <add>, %138, %cst_88 [0] : vector<32x128xf32> to vector<128xf32>
    %140 = vector.shape_cast %139 : vector<128xf32> to vector<1x128xf32>
    %c0_89 = arith.constant 0 : index
    %c0_90 = arith.constant 0 : index
    %141 = vector.load %arg5[%c0_89, %c0_90] : memref<128x128xf32, #tpu.memory_space<vmem>>, vector<128x128xf32>
    %cst_91 = arith.constant dense<0.000000e+00> : vector<1x128xf32>
    %142 = tpu.matmul %140, %141, %cst_91 {dimension_numbers = #tpu.dot_dimension_numbers<[1], [0], [0], [1], [0, 0, 1, 1], [], []>} : vector<1x128xf32>, vector<128x128xf32>, vector<1x128xf32> -> vector<1x128xf32>
    %cst_92 = arith.constant 0.001953125 : f32
    %143 = vector.broadcast %cst_92 : f32 to vector<1x128xf32>
    %144 = arith.mulf %142, %143 : vector<1x128xf32>
    %c0_93 = arith.constant 0 : index
    %c0_94 = arith.constant 0 : index
    %145 = vector.load %arg6[%c0_93, %c0_94] : memref<2x128xf32, #tpu.memory_space<vmem>>, vector<1x128xf32>
    %cst_95 = arith.constant 9.99999974E-6 : f32
    %146 = vector.broadcast %cst_95 : f32 to vector<1x128xf32>
    %147 = arith.addf %144, %146 : vector<1x128xf32>
    %148 = math.rsqrt %147 : vector<1x128xf32>
    %149 = arith.mulf %145, %148 : vector<1x128xf32>
    %c1_96 = arith.constant 1 : index
    %c0_97 = arith.constant 0 : index
    %150 = vector.load %arg6[%c1_96, %c0_97] : memref<2x128xf32, #tpu.memory_space<vmem>>, vector<1x128xf32>
    %151 = arith.mulf %135, %149 : vector<1x128xf32>
    %152 = arith.subf %150, %151 : vector<1x128xf32>
    %153 = vector.broadcast %149 : vector<1x128xf32> to vector<32x128xf32>
    %154 = arith.mulf %129, %153 : vector<32x128xf32>
    %155 = vector.broadcast %152 : vector<1x128xf32> to vector<32x128xf32>
    %156 = arith.addf %154, %155 : vector<32x128xf32>
    %157 = vector.shape_cast %156 : vector<32x128xf32> to vector<2x16x128xf32>
    %c0_98 = arith.constant 0 : index
    %c0_99 = arith.constant 0 : index
    %c0_100 = arith.constant 0 : index
    %158 = vector.load %arg7[%c0_98, %c0_99, %c0_100] : memref<2x16x128xf32, #tpu.memory_space<vmem>>, vector<2x16x128xf32>
    tpu.vector_store %arg7[%c0_98, %c0_99, %c0_100], %157 {strides = array<i32>} : memref<2x16x128xf32, #tpu.memory_space<vmem>>, vector<2x16x128xf32>,
    return
  }
}

</mosaic_0001>

<llo_original>
// kernel: tpu_custom_call.1
$region0: #{tpu_custom_call.1}
  #allocation0 [shape = 'u32[]', space=smem, size = 0x4, offset = 0x4, fixed_abs, tag = 'smem constant byte address 0x4 - core index']
  #allocation1 [shape = 'u32[72,128]{1,0:T(1,128)}', space=vmem, size = 0x9000, scoped, tag = 'internal scratch']
  #allocation2 [shape = 'f32[2,18,72]{2,1,0:T(8,128)}', space=vmem, size = 0x6000, scoped, tag = 'scratch operand']
  #allocation3 [shape = 'f32[2,18,72]{2,1,0:T(8,128)}', space=vmem, size = 0x6000, scoped, tag = 'scratch operand']
  %s0 = inlined_call_operand.hbm [shape: f32[2,4,16,16], index: 0, kind: input, shape index: {}]
  %s1 = inlined_call_operand.hbm [shape: f32[3,72,72], index: 1, kind: input, shape index: {}]
  %s2 = inlined_call_operand.hbm [shape: f32[72,72], index: 2, kind: input, shape index: {}]
  %s3 = inlined_call_operand.vmem [shape: f32[2,72], index: 3, kind: input, shape index: {}]
  %s4 = inlined_call_operand.hbm [shape: f32[3,72,128], index: 4, kind: input, shape index: {}]
  %s5 = inlined_call_operand.hbm [shape: f32[128,128], index: 5, kind: input, shape index: {}]
  %s6 = inlined_call_operand.vmem [shape: f32[2,128], index: 6, kind: input, shape index: {}]
  %s7 = inlined_call_operand.hbm [shape: f32[2,16,128], index: 7, kind: output, shape index: {}]
  %s8 = sld [smem:[#allocation0]]
  $region58: #{tpu_custom_call.1} parent=0
    _
  %s10 = ssub.s32 1, %s8
  %s11 = scalar_select 0, %s10, %s8
  $region1: #{tpu_custom_call.1} parent=0
    #allocation4 [shape = 'u8[65536]{0}', space=vmem, size = 0x10000, scoped, tag = 'input window, operand 0, single buffered']
    #allocation5 [shape = 's32[1]{0}', space=sflag, size = 0x4, scoped, tag = 'scoped memory for tpu_custom_call.1']
    #allocation6 [shape = 's32[1]{0}', space=sflag, size = 0x4, scoped, tag = 'scoped memory for tpu_custom_call.1']
    #allocation7 [shape = 'u8[110592]{0}', space=vmem, size = 0x1b000, scoped, tag = 'input window, operand 1, single buffered']
    #allocation8 [shape = 's32[1]{0}', space=sflag, size = 0x4, scoped, tag = 'scoped memory for tpu_custom_call.1']
    #allocation9 [shape = 'u8[36864]{0}', space=vmem, size = 0x9000, scoped, tag = 'input window, operand 2, single buffered']
    #allocation10 [shape = 'u8[110592]{0}', space=vmem, size = 0x1b000, scoped, tag = 'input window, operand 4, single buffered']
    #allocation11 [shape = 's32[1]{0}', space=sflag, size = 0x4, scoped, tag = 'scoped memory for tpu_custom_call.1']
    #allocation12 [shape = 'u8[65536]{0}', space=vmem, size = 0x10000, scoped, tag = 'input window, operand 5, single buffered']
    #allocation13 [shape = 'u8[16384]{0}', space=vmem, size = 0x4000, scoped, tag = 'output window, operand 0, single buffered']
    %12 = vsyncpa [#allocation5], 0
    %13 = vsyncpa [#allocation8], 0
    %14 = vsyncpa [#allocation11], 0
    %15 = vsyncpa [#allocation6], 0
    // Predicated region
    $region2: #{tpu_custom_call.1} parent=1 // pred_check
      _
    $region3: #{tpu_custom_call.1} parent=1 // pred_check_branch
      %17 = sbr.rel (0) target = $region5
    $region4: #{tpu_custom_call.1} parent=1 // pred_region
      %19 = vsyncadd [#allocation5], 0
      %s20 = sshll.u32 %s0, 4
      %s21 = int_to_ptr.hbm [resolvable:$true] %s20
      %s22 = sshll.u32 [#allocation4], 4
      %s23 = int_to_ptr.vmem [resolvable:$true] %s22
      %28 = dma.hbm_to_vmem [thread:$0]  %s21, 2048, %s23, [#allocation5], 128, 128, 8
    $region5: #{tpu_custom_call.1} parent=1 // pred_fallthru
      _
    // Predicated region
    $region6: #{tpu_custom_call.1} parent=1 // pred_check
      _
    $region7: #{tpu_custom_call.1} parent=1 // pred_check_branch
      %30 = sbr.rel (0) target = $region9
    $region8: #{tpu_custom_call.1} parent=1 // pred_region
      %32 = vsyncadd [#allocation8], 0
      %s33 = sshll.u32 %s1, 4
      %s34 = int_to_ptr.hbm [resolvable:$true] %s33
      %s35 = sshll.u32 [#allocation7], 4
      %s36 = int_to_ptr.vmem [resolvable:$true] %s35
      %41 = dma.hbm_to_vmem [thread:$0]  %s34, 3456, %s36, [#allocation8], 128, 128, 8
    $region9: #{tpu_custom_call.1} parent=1 // pred_fallthru
      _
    // Predicated region
    $region10: #{tpu_custom_call.1} parent=1 // pred_check
      _
    $region11: #{tpu_custom_call.1} parent=1 // pred_check_branch
      %43 = sbr.rel (0) target = $region13
    $region12: #{tpu_custom_call.1} parent=1 // pred_region
      %45 = vsyncadd [#allocation8], 0
      %s46 = sshll.u32 %s2, 4
      %s47 = int_to_ptr.hbm [resolvable:$true] %s46
      %s48 = sshll.u32 [#allocation9], 4
      %s49 = int_to_ptr.vmem [resolvable:$true] %s48
      %54 = dma.hbm_to_vmem [thread:$0]  %s47, 1152, %s49, [#allocation8], 128, 128, 8
    $region13: #{tpu_custom_call.1} parent=1 // pred_fallthru
      _
    // Predicated region
    $region14: #{tpu_custom_call.1} parent=1 // pred_check
      _
    $region15: #{tpu_custom_call.1} parent=1 // pred_check_branch
      %56 = sbr.rel (0) target = $region17
    $region16: #{tpu_custom_call.1} parent=1 // pred_region
      _
    $region17: #{tpu_custom_call.1} parent=1 // pred_fallthru
      _
    // Predicated region
    $region18: #{tpu_custom_call.1} parent=1 // pred_check
      _
    $region19: #{tpu_custom_call.1} parent=1 // pred_check_branch
      %58 = sbr.rel (0) target = $region21
    $region20: #{tpu_custom_call.1} parent=1 // pred_region
      %60 = vsyncadd [#allocation11], 0
      %s61 = sshll.u32 %s4, 4
      %s62 = int_to_ptr.hbm [resolvable:$true] %s61
      %s63 = sshll.u32 [#allocation10], 4
      %s64 = int_to_ptr.vmem [resolvable:$true] %s63
      %69 = dma.hbm_to_vmem [thread:$0]  %s62, 3456, %s64, [#allocation11], 128, 128, 8
    $region21: #{tpu_custom_call.1} parent=1 // pred_fallthru
      _
    // Predicated region
    $region22: #{tpu_custom_call.1} parent=1 // pred_check
      _
    $region23: #{tpu_custom_call.1} parent=1 // pred_check_branch
      %71 = sbr.rel (0) target = $region25
    $region24: #{tpu_custom_call.1} parent=1 // pred_region
      %73 = vsyncadd [#allocation11], 0
      %s74 = sshll.u32 %s5, 4
      %s75 = int_to_ptr.hbm [resolvable:$true] %s74
      %s76 = sshll.u32 [#allocation12], 4
      %s77 = int_to_ptr.vmem [resolvable:$true] %s76
      %82 = dma.hbm_to_vmem [thread:$0]  %s75, 2048, %s77, [#allocation11], 128, 128, 8
    $region25: #{tpu_custom_call.1} parent=1 // pred_fallthru
      _
    // Predicated region
    $region26: #{tpu_custom_call.1} parent=1 // pred_check
      _
    $region27: #{tpu_custom_call.1} parent=1 // pred_check_branch
      %84 = sbr.rel (0) target = $region29
    $region28: #{tpu_custom_call.1} parent=1 // pred_region
      _
    $region29: #{tpu_custom_call.1} parent=1 // pred_fallthru
      _
    // Predicated region
    $region30: #{tpu_custom_call.1} parent=1 // pred_check
      _
    $region31: #{tpu_custom_call.1} parent=1 // pred_check_branch
      %86 = sbr.rel (0) target = $region33
    $region32: #{tpu_custom_call.1} parent=1 // pred_region
      %88 = dma.done [#allocation5], 2048
    $region33: #{tpu_custom_call.1} parent=1 // pred_fallthru
      _
    // Predicated region
    $region34: #{tpu_custom_call.1} parent=1 // pred_check
      _
    $region35: #{tpu_custom_call.1} parent=1 // pred_check_branch
      %90 = sbr.rel (0) target = $region37
    $region36: #{tpu_custom_call.1} parent=1 // pred_region
      %92 = dma.done [#allocation8], 3456
    $region37: #{tpu_custom_call.1} parent=1 // pred_fallthru
      _
    // Predicated region
    $region38: #{tpu_custom_call.1} parent=1 // pred_check
      _
    $region39: #{tpu_custom_call.1} parent=1 // pred_check_branch
      %94 = sbr.rel (0) target = $region41
    $region40: #{tpu_custom_call.1} parent=1 // pred_region
      %96 = dma.done [#allocation8], 1152
    $region41: #{tpu_custom_call.1} parent=1 // pred_fallthru
      _
    // Predicated region
    $region42: #{tpu_custom_call.1} parent=1 // pred_check
      _
    $region43: #{tpu_custom_call.1} parent=1 // pred_check_branch
      %98 = sbr.rel (0) target = $region45
    $region44: #{tpu_custom_call.1} parent=1 // pred_region
      %100 = dma.done [#allocation11], 3456
    $region45: #{tpu_custom_call.1} parent=1 // pred_fallthru
      _
    // Predicated region
    $region46: #{tpu_custom_call.1} parent=1 // pred_check
      _
    $region47: #{tpu_custom_call.1} parent=1 // pred_check_branch
      %102 = sbr.rel (0) target = $region49
    $region48: #{tpu_custom_call.1} parent=1 // pred_region
      %104 = dma.done [#allocation11], 2048
    $region49: #{tpu_custom_call.1} parent=1 // pred_fallthru
      _
    %v105 = vld [vmem:[#allocation4] sm:$0xff]
    %v106 = vld [vmem:[#allocation4 + $0x8] sm:$0xff]
    %v107 = vld [vmem:[#allocation4 + $0x40] sm:$0xff]
    %v108 = vld [vmem:[#allocation4 + $0x48] sm:$0xff]
    %v109 = vmax.f32 %v105, 0.0
    %v110 = vmax.f32 %v106, 0.0
    %v111 = vmax.f32 %v107, 0.0
    %v112 = vmax.f32 %v108, 0.0
    %117 = vrot.lane.b32.xlu0 %v109, 1
    %v118 = vpop.permute.xlu0 %117
    %119 = vrot.lane.b32.xlu0 %v110, 1
    %v120 = vpop.permute.xlu0 %119
    %121 = vrot.lane.b32.xlu0 %v111, 1
    %v122 = vpop.permute.xlu0 %121
    %123 = vrot.lane.b32.xlu0 %v112, 1
    %v124 = vpop.permute.xlu0 %123
    %vm129 = vcmask 138248
    %130 = vst.msk [vmem:[#allocation2 + $0x1] sm:$0xff] %vm129, %v118
    %131 = vst.msk [vmem:[#allocation2 + $0x9] sm:$0xff] %vm129, %v120
    %132 = vst.msk [vmem:[#allocation2 + $0x19] sm:$0xff] %vm129, %v122
    %133 = vst.msk [vmem:[#allocation2 + $0x21] sm:$0xff] %vm129, %v124
    %s134 = scalar_lea.vmem [#allocation4], 16
    %v135 = vld [vmem:[%s134] sm:$0xff]
    %v136 = vld [vmem:[%s134 + $0x8] sm:$0xff]
    %v137 = vld [vmem:[%s134 + $0x40] sm:$0xff]
    %v138 = vld [vmem:[%s134 + $0x48] sm:$0xff]
    %v139 = vmax.f32 %v135, 0.0
    %v140 = vmax.f32 %v136, 0.0
    %v141 = vmax.f32 %v137, 0.0
    %v142 = vmax.f32 %v138, 0.0
    %147 = vrot.lane.b32.xlu0 %v139, 19
    %v148 = vpop.permute.xlu0 %147
    %149 = vrot.lane.b32.xlu0 %v140, 19
    %v150 = vpop.permute.xlu0 %149
    %151 = vrot.lane.b32.xlu0 %v141, 19
    %v152 = vpop.permute.xlu0 %151
    %153 = vrot.lane.b32.xlu0 %v142, 19
    %v154 = vpop.permute.xlu0 %153
    %vm159 = vcmask 285848
    %160 = vst.msk [vmem:[#allocation2 + $0x1] sm:$0xff] %vm159, %v148
    %161 = vst.msk [vmem:[#allocation2 + $0x9] sm:$0xff] %vm159, %v150
    %162 = vst.msk [vmem:[#allocation2 + $0x19] sm:$0xff] %vm159, %v152
    %163 = vst.msk [vmem:[#allocation2 + $0x21] sm:$0xff] %vm159, %v154
    %s164 = scalar_lea.vmem [#allocation4], 32
    %v165 = vld [vmem:[%s164] sm:$0xff]
    %v166 = vld [vmem:[%s164 + $0x8] sm:$0xff]
    %v167 = vld [vmem:[%s164 + $0x40] sm:$0xff]
    %v168 = vld [vmem:[%s164 + $0x48] sm:$0xff]
    %v169 = vmax.f32 %v165, 0.0
    %v170 = vmax.f32 %v166, 0.0
    %v171 = vmax.f32 %v167, 0.0
    %v172 = vmax.f32 %v168, 0.0
    %177 = vrot.lane.b32.xlu0 %v169, 37
    %v178 = vpop.permute.xlu0 %177
    %179 = vrot.lane.b32.xlu0 %v170, 37
    %v180 = vpop.permute.xlu0 %179
    %181 = vrot.lane.b32.xlu0 %v171, 37
    %v182 = vpop.permute.xlu0 %181
    %183 = vrot.lane.b32.xlu0 %v172, 37
    %v184 = vpop.permute.xlu0 %183
    %vm189 = vcmask 433448
    %190 = vst.msk [vmem:[#allocation2 + $0x1] sm:$0xff] %vm189, %v178
    %191 = vst.msk [vmem:[#allocation2 + $0x9] sm:$0xff] %vm189, %v180
    %192 = vst.msk [vmem:[#allocation2 + $0x19] sm:$0xff] %vm189, %v182
    %193 = vst.msk [vmem:[#allocation2 + $0x21] sm:$0xff] %vm189, %v184
    %s194 = scalar_lea.vmem [#allocation4], 48
    %v195 = vld [vmem:[%s194] sm:$0xff]
    %v196 = vld [vmem:[%s194 + $0x8] sm:$0xff]
    %v197 = vld [vmem:[%s194 + $0x40] sm:$0xff]
    %v198 = vld [vmem:[%s194 + $0x48] sm:$0xff]
    %v199 = vmax.f32 %v195, 0.0
    %v200 = vmax.f32 %v196, 0.0
    %v201 = vmax.f32 %v197, 0.0
    %v202 = vmax.f32 %v198, 0.0
    %207 = vrot.lane.b32.xlu0 %v199, 55
    %v208 = vpop.permute.xlu0 %207
    %209 = vrot.lane.b32.xlu0 %v200, 55
    %v210 = vpop.permute.xlu0 %209
    %211 = vrot.lane.b32.xlu0 %v201, 55
    %v212 = vpop.permute.xlu0 %211
    %213 = vrot.lane.b32.xlu0 %v202, 55
    %v214 = vpop.permute.xlu0 %213
    %vm219 = vcmask 581048
    %220 = vst.msk [vmem:[#allocation2 + $0x1] sm:$0xff] %vm219, %v208
    %221 = vst.msk [vmem:[#allocation2 + $0x9] sm:$0xff] %vm219, %v210
    %222 = vst.msk [vmem:[#allocation2 + $0x19] sm:$0xff] %vm219, %v212
    %223 = vst.msk [vmem:[#allocation2 + $0x21] sm:$0xff] %vm219, %v214
    %v224 = vlaneseq
    %v225 = vshrl.u32 %v224, 7
    %v226 = vadd.s32 %v225, 8
    %v227 = vadd.s32 %v225, 16
    %v228 = vlaneseq
    %v229 = vand.u32 %v228, 127
    %vm230 = vcmp.lt.s32.totalorder %v229, 0
    %v231 = vsub.s32 0, %v229
    %v232 = vsel %vm230, %v231, %v229
    %v233 = vand.u32 %v232, 65535
    %v234 = vshrl.u32 %v232, 16
    %v236 = vmul.u32 %v233, 14564
    %v237 = vmul.u32 %v233, 58254
    %v238 = vmul.u32 %v234, 14564
    %v239 = vmul.u32 %v234, 58254
    %v240 = vshll.u32 %v237, 16
    %v241 = vshrl.u32 %v237, 16
    %v242 = vshll.u32 %v238, 16
    %v243 = vshrl.u32 %v238, 16
    %vm244 = vc.u32 %v236, %v240
    %v245 = vsel %vm244, 1, 0
    %v246 = vadd.s32 %v236, %v240
    %v247 = vadd.s32 %v239, %v245
    %vm248 = vc.u32 %v246, %v242
    %v249 = vsel %vm248, 1, 0
    %v250 = vadd.s32 %v246, %v242
    %v251 = vadd.s32 %v247, %v249
    %v252 = vadd.s32 %v251, %v241
    %v253 = vadd.s32 %v252, %v243
    %v254 = vshrl.u32 %v253, 4
    %v255 = vmul.u32 %v254, 18
    %v256 = vsub.s32 %v232, %v255
    %v257 = vsub.s32 0, %v256
    %v258 = vsel %vm230, %v257, %v256
    %vm259 = vcmp.ne.s32.totalorder %v258, 0
    %vm260 = vcmp.lt.s32.totalorder %v258, 0
    %vm261 = vmand %vm260, %vm259
    %v262 = vadd.s32 %v258, 18
    %v263 = vsel %vm261, %v262, %v258
    %vm264 = vcmp.ge.s32.totalorder %v225, 1
    %vm265 = vcmp.ge.s32.totalorder %v226, 1
    %vm266 = vcmp.ge.s32.totalorder %v227, 1
    %vm267 = vcmp.lt.s32.totalorder %v225, 17
    %vm268 = vcmp.lt.s32.totalorder %v226, 17
    %vm269 = vcmp.lt.s32.totalorder %v227, 17
    %vm270 = vmand %vm264, %vm267
    %vm271 = vmand %vm265, %vm268
    %vm272 = vmand %vm266, %vm269
    %vm273 = vcmp.ge.s32.totalorder %v263, 1
    %vm274 = vmand %vm270, %vm273
    %vm275 = vmand %vm271, %vm273
    %vm276 = vmand %vm272, %vm273
    %vm277 = vcmp.lt.s32.totalorder %v263, 17
    %vm278 = vmand %vm274, %vm277
    %vm279 = vmand %vm275, %vm277
    %vm280 = vmand %vm276, %vm277
    %v281 = vld [vmem:[#allocation2] sm:$0xff]
    %v282 = vld [vmem:[#allocation2 + $0x8] sm:$0xff]
    %v283 = vld [vmem:[#allocation2 + $0x10] sm:$0x3]
    %v284 = vld [vmem:[#allocation2 + $0x18] sm:$0xff]
    %v285 = vld [vmem:[#allocation2 + $0x20] sm:$0xff]
    %v286 = vld [vmem:[#allocation2 + $0x28] sm:$0x3]
    %v287 = vsel %vm278, 1, 0
    %v288 = vsel %vm279, 1, 0
    %v289 = vsel %vm280, 1, 0
    %vm290 = vcmp.eq.s32.totalorder %v287, 1
    %vm291 = vcmp.eq.s32.totalorder %v288, 1
    %vm292 = vcmp.eq.s32.totalorder %v289, 1
    %v293 = vsel %vm290, %v281, 0.0
    %v294 = vsel %vm291, %v282, 0.0
    %v295 = vsel %vm292, %v283, 0.0
    %v296 = vsel %vm290, %v284, 0.0
    %v297 = vsel %vm291, %v285, 0.0
    %v298 = vsel %vm292, %v286, 0.0
    %v299 = vld [vmem:[#allocation7] sm:$0xff]
    %v300 = vld [vmem:[#allocation7 + $0x8] sm:$0xff]
    %v301 = vld [vmem:[#allocation7 + $0x10] sm:$0xff]
    %v302 = vld [vmem:[#allocation7 + $0x18] sm:$0xff]
    %v303 = vld [vmem:[#allocation7 + $0x20] sm:$0xff]
    %v304 = vld [vmem:[#allocation7 + $0x28] sm:$0xff]
    %v305 = vld [vmem:[#allocation7 + $0x30] sm:$0xff]
    %v306 = vld [vmem:[#allocation7 + $0x38] sm:$0xff]
    %v307 = vld [vmem:[#allocation7 + $0x40] sm:$0xff]
    %vm314 = vcmask 1046528
    %v315 = vrot.slane %v293, 1
    %v316 = vrot.slane %v294, 1
    %v317 = vsel %vm314, %v315, %v316
    %v318 = vrot.slane %v295, 1
    %v319 = vsel %vm314, %v316, %v318
    %v320 = vrot.slane %v296, 1
    %v321 = vrot.slane %v297, 1
    %v322 = vsel %vm314, %v320, %v321
    %v323 = vrot.slane %v298, 1
    %v324 = vsel %vm314, %v321, %v323
    %s325 = scalar_lea.vmem [#allocation7], 72
    %v326 = vld [vmem:[%s325] sm:$0xff]
    %v327 = vld [vmem:[%s325 + $0x8] sm:$0xff]
    %v328 = vld [vmem:[%s325 + $0x10] sm:$0xff]
    %v329 = vld [vmem:[%s325 + $0x18] sm:$0xff]
    %v330 = vld [vmem:[%s325 + $0x20] sm:$0xff]
    %v331 = vld [vmem:[%s325 + $0x28] sm:$0xff]
    %v332 = vld [vmem:[%s325 + $0x30] sm:$0xff]
    %v333 = vld [vmem:[%s325 + $0x38] sm:$0xff]
    %v334 = vld [vmem:[%s325 + $0x40] sm:$0xff]
    %vm335 = vcmask 588800
    %v336 = vsel %vm335, %v317, 0
    %v338 = vsel %vm335, %v319, 0
    %v340 = vsel %vm335, %v322, 0
    %v342 = vsel %vm335, %v324, 0
    %344 = vmatpush.msra.mxu0 0.0
    %345 = vmatpush.msra.mxu0 0.0
    %346 = vmatpush.msra.mxu0 0.0
    %347 = vmatpush.msra.mxu0 0.0
    %348 = vmatpush.msra.mxu0 0.0
    %349 = vmatpush.msra.mxu0 0.0
    %350 = vmatpush.msra.mxu0 0.0
    %351 = vmatpush.msra.mxu0 %v334
    %352 = vmatpush.msra.mxu0 %v333
    %353 = vmatpush.msra.mxu0 %v332
    %354 = vmatpush.msra.mxu0 %v331
    %355 = vmatpush.msra.mxu0 %v330
    %356 = vmatpush.msra.mxu0 %v329
    %357 = vmatpush.msra.mxu0 %v328
    %358 = vmatpush.msra.mxu0 %v327
    %359 = vmatpush.msra.mxu0 %v326
    %360 = vmatmul.f32.gmra.mxu0 %v336
    %v361 = vpop.f32.mrf.mxu0
    %v362 = vadd.f32 0.0, %v361
    %363 = vmatmul.f32.gmra.mxu0 %v338
    %v364 = vpop.f32.mrf.mxu0
    %v365 = vadd.f32 0.0, %v364
    %366 = vmatmul.f32.gmra.mxu0 %v340
    %v367 = vpop.f32.mrf.mxu0
    %v368 = vadd.f32 0.0, %v367
    %369 = vmatmul.f32.gmra.mxu0 %v342
    %v370 = vpop.f32.mrf.mxu0
    %v371 = vadd.f32 0.0, %v370
    %372 = vdwg.mxu0
    %v373 = vsel %vm335, %v293, 0
    %v375 = vsel %vm335, %v294, 0
    %v377 = vsel %vm335, %v296, 0
    %v379 = vsel %vm335, %v297, 0
    %381 = vmatpush.msra.mxu0 0.0
    %382 = vmatpush.msra.mxu0 0.0
    %383 = vmatpush.msra.mxu0 0.0
    %384 = vmatpush.msra.mxu0 0.0
    %385 = vmatpush.msra.mxu0 0.0
    %386 = vmatpush.msra.mxu0 0.0
    %387 = vmatpush.msra.mxu0 0.0
    %388 = vmatpush.msra.mxu0 %v307
    %389 = vmatpush.msra.mxu0 %v306
    %390 = vmatpush.msra.mxu0 %v305
    %391 = vmatpush.msra.mxu0 %v304
    %392 = vmatpush.msra.mxu0 %v303
    %393 = vmatpush.msra.mxu0 %v302
    %394 = vmatpush.msra.mxu0 %v301
    %395 = vmatpush.msra.mxu0 %v300
    %396 = vmatpush.msra.mxu0 %v299
    %397 = vmatmul.f32.gmra.mxu0 %v373
    %v398 = vpop.f32.mrf.mxu0
    %v399 = vadd.f32 %v362, %v398
    %400 = vmatmul.f32.gmra.mxu0 %v375
    %v401 = vpop.f32.mrf.mxu0
    %v402 = vadd.f32 %v365, %v401
    %403 = vmatmul.f32.gmra.mxu0 %v377
    %v404 = vpop.f32.mrf.mxu0
    %v405 = vadd.f32 %v368, %v404
    %406 = vmatmul.f32.gmra.mxu0 %v379
    %v407 = vpop.f32.mrf.mxu0
    %v408 = vadd.f32 %v371, %v407
    %409 = vdwg.mxu0
    %vm410 = vcmask 1045504
    %v411 = vrot.slane %v293, 2
    %v412 = vrot.slane %v294, 2
    %v413 = vsel %vm410, %v411, %v412
    %v414 = vrot.slane %v295, 2
    %v415 = vsel %vm410, %v412, %v414
    %v416 = vrot.slane %v296, 2
    %v417 = vrot.slane %v297, 2
    %v418 = vsel %vm410, %v416, %v417
    %v419 = vrot.slane %v298, 2
    %v420 = vsel %vm410, %v417, %v419
    %s421 = scalar_lea.vmem [#allocation7], 144
    %v422 = vld [vmem:[%s421] sm:$0xff]
    %v423 = vld [vmem:[%s421 + $0x8] sm:$0xff]
    %v424 = vld [vmem:[%s421 + $0x10] sm:$0xff]
    %v425 = vld [vmem:[%s421 + $0x18] sm:$0xff]
    %v426 = vld [vmem:[%s421 + $0x20] sm:$0xff]
    %v427 = vld [vmem:[%s421 + $0x28] sm:$0xff]
    %v428 = vld [vmem:[%s421 + $0x30] sm:$0xff]
    %v429 = vld [vmem:[%s421 + $0x38] sm:$0xff]
    %v430 = vld [vmem:[%s421 + $0x40] sm:$0xff]
    %v431 = vsel %vm335, %v413, 0
    %v433 = vsel %vm335, %v415, 0
    %v435 = vsel %vm335, %v418, 0
    %v437 = vsel %vm335, %v420, 0
    %439 = vmatpush.msra.mxu0 0.0
    %440 = vmatpush.msra.mxu0 0.0
    %441 = vmatpush.msra.mxu0 0.0
    %442 = vmatpush.msra.mxu0 0.0
    %443 = vmatpush.msra.mxu0 0.0
    %444 = vmatpush.msra.mxu0 0.0
    %445 = vmatpush.msra.mxu0 0.0
    %446 = vmatpush.msra.mxu0 %v430
    %447 = vmatpush.msra.mxu0 %v429
    %448 = vmatpush.msra.mxu0 %v428
    %449 = vmatpush.msra.mxu0 %v427
    %450 = vmatpush.msra.mxu0 %v426
    %451 = vmatpush.msra.mxu0 %v425
    %452 = vmatpush.msra.mxu0 %v424
    %453 = vmatpush.msra.mxu0 %v423
    %454 = vmatpush.msra.mxu0 %v422
    %455 = vmatmul.f32.gmra.mxu0 %v431
    %v456 = vpop.f32.mrf.mxu0
    %v457 = vadd.f32 0.0, %v456
    %458 = vmatmul.f32.gmra.mxu0 %v433
    %v459 = vpop.f32.mrf.mxu0
    %v460 = vadd.f32 0.0, %v459
    %461 = vmatmul.f32.gmra.mxu0 %v435
    %v462 = vpop.f32.mrf.mxu0
    %v463 = vadd.f32 0.0, %v462
    %464 = vmatmul.f32.gmra.mxu0 %v437
    %v465 = vpop.f32.mrf.mxu0
    %v466 = vadd.f32 0.0, %v465
    %467 = vdwg.mxu0
    %v468 = vadd.f32 %v399, %v457
    %v469 = vadd.f32 %v402, %v460
    %v470 = vadd.f32 %v405, %v463
    %v471 = vadd.f32 %v408, %v466
    %v472 = vsel %vm335, %v468, 0.0
    %v473 = vsel %vm335, %v469, 0.0
    %v474 = vadd.f32 %v472, %v473
    %v475 = vsel %vm335, %v470, 0.0
    %v476 = vadd.f32 %v474, %v475
    %v477 = vsel %vm335, %v471, 0.0
    %v478 = vadd.f32 %v476, %v477
    %v479 = vrot.slane %v478, 4
    %v480 = vadd.f32 %v478, %v479
    %v481 = vrot.slane %v480, 2
    %v482 = vadd.f32 %v480, %v481
    %v483 = vrot.slane %v482, 1
    %v484 = vadd.f32 %v482, %v483
    %v485 = vld [vmem:[#allocation9] sm:$0xff]
    %v486 = vld [vmem:[#allocation9 + $0x8] sm:$0xff]
    %v487 = vld [vmem:[#allocation9 + $0x10] sm:$0xff]
    %v488 = vld [vmem:[#allocation9 + $0x18] sm:$0xff]
    %v489 = vld [vmem:[#allocation9 + $0x20] sm:$0xff]
    %v490 = vld [vmem:[#allocation9 + $0x28] sm:$0xff]
    %v491 = vld [vmem:[#allocation9 + $0x30] sm:$0xff]
    %v492 = vld [vmem:[#allocation9 + $0x38] sm:$0xff]
    %v493 = vld [vmem:[#allocation9 + $0x40] sm:$0xff]
    %v495 = vsel %vm335, %v484, 0
    %497 = vmatpush.msra.mxu0 0.0
    %498 = vmatpush.msra.mxu0 0.0
    %499 = vmatpush.msra.mxu0 0.0
    %500 = vmatpush.msra.mxu0 0.0
    %501 = vmatpush.msra.mxu0 0.0
    %502 = vmatpush.msra.mxu0 0.0
    %503 = vmatpush.msra.mxu0 0.0
    %504 = vmatpush.msra.mxu0 %v493
    %505 = vmatpush.msra.mxu0 %v492
    %506 = vmatpush.msra.mxu0 %v491
    %507 = vmatpush.msra.mxu0 %v490
    %508 = vmatpush.msra.mxu0 %v489
    %509 = vmatpush.msra.mxu0 %v488
    %510 = vmatpush.msra.mxu0 %v487
    %511 = vmatpush.msra.mxu0 %v486
    %512 = vmatpush.msra.mxu0 %v485
    %513 = vmatmul.f32.gmra.mxu0 %v495
    %v514 = vpop.f32.mrf.mxu0
    %v515 = vadd.f32 0.0, %v514
    %516 = vdwg.mxu0
    %v517 = vmul.f32 %v515, 0.001953125
    %v518 = vperm.slane %v517, 0
    %v519 = vsub.f32 %v468, %v518
    %v520 = vsub.f32 %v469, %v518
    %v521 = vsub.f32 %v470, %v518
    %v522 = vsub.f32 %v471, %v518
    %v523 = vmul.f32 %v519, %v519
    %v524 = vmul.f32 %v520, %v520
    %v525 = vmul.f32 %v521, %v521
    %v526 = vmul.f32 %v522, %v522
    %v527 = vsel %vm335, %v523, 0.0
    %v528 = vsel %vm335, %v524, 0.0
    %v529 = vadd.f32 %v527, %v528
    %v530 = vsel %vm335, %v525, 0.0
    %v531 = vadd.f32 %v529, %v530
    %v532 = vsel %vm335, %v526, 0.0
    %v533 = vadd.f32 %v531, %v532
    %v534 = vrot.slane %v533, 4
    %v535 = vadd.f32 %v533, %v534
    %v536 = vrot.slane %v535, 2
    %v537 = vadd.f32 %v535, %v536
    %v538 = vrot.slane %v537, 1
    %v539 = vadd.f32 %v537, %v538
    %v541 = vsel %vm335, %v539, 0
    %543 = vmatpush.msra.mxu0 0.0
    %544 = vmatpush.msra.mxu0 0.0
    %545 = vmatpush.msra.mxu0 0.0
    %546 = vmatpush.msra.mxu0 0.0
    %547 = vmatpush.msra.mxu0 0.0
    %548 = vmatpush.msra.mxu0 0.0
    %549 = vmatpush.msra.mxu0 0.0
    %550 = vmatpush.msra.mxu0 %v493
    %551 = vmatpush.msra.mxu0 %v492
    %552 = vmatpush.msra.mxu0 %v491
    %553 = vmatpush.msra.mxu0 %v490
    %554 = vmatpush.msra.mxu0 %v489
    %555 = vmatpush.msra.mxu0 %v488
    %556 = vmatpush.msra.mxu0 %v487
    %557 = vmatpush.msra.mxu0 %v486
    %558 = vmatpush.msra.mxu0 %v485
    %559 = vmatmul.f32.gmra.mxu0 %v541
    %v560 = vpop.f32.mrf.mxu0
    %v561 = vadd.f32 0.0, %v560
    %562 = vdwg.mxu0
    %v563 = vmul.f32 %v561, 0.001953125
    %v564 = vld [vmem:[%s3] sm:$0x1]
    %v565 = vadd.f32 %v563, 1e-05
    %v566 = vrsqrt.pop %v565
    %v567 = vmul.f32 %v566, %v565
    %v568 = vmul.f32 %v567, %v566
    %v569 = vmul.f32 0.5, %v568
    %v570 = vsub.f32 1.5, %v569
    %v571 = vmul.f32 %v566, %v570
    %vm572 = vweird.f32 %v565
    %vm573 = vweird.f32 %v566
    %vm574 = vmor %vm572, %vm573
    %v575 = vsel %vm574, %v566, %v571
    %v576 = vmul.f32 %v564, %v575
    %v577 = vld [vmem:[%s3 + $0x1] sm:$0x1]
    %v578 = vmul.f32 %v517, %v576
    %v579 = vsub.f32 %v577, %v578
    %v580 = vperm.slane %v576, 0
    %v581 = vmul.f32 %v468, %v580
    %v582 = vmul.f32 %v469, %v580
    %v583 = vmul.f32 %v470, %v580
    %v584 = vmul.f32 %v471, %v580
    %v585 = vperm.slane %v579, 0
    %v586 = vadd.f32 %v581, %v585
    %v587 = vadd.f32 %v582, %v585
    %v588 = vadd.f32 %v583, %v585
    %v589 = vadd.f32 %v584, %v585
    %v590 = vmax.f32 %v586, 0.0
    %v591 = vmax.f32 %v587, 0.0
    %v592 = vmax.f32 %v588, 0.0
    %v593 = vmax.f32 %v589, 0.0
    %594 = vst.msk [vmem:[#allocation3 + $0x1] sm:$0xff] %vm335, %v590
    %595 = vst.msk [vmem:[#allocation3 + $0x9] sm:$0xff] %vm335, %v591
    %596 = vst.msk [vmem:[#allocation3 + $0x19] sm:$0xff] %vm335, %v592
    %597 = vst.msk [vmem:[#allocation3 + $0x21] sm:$0xff] %vm335, %v593
    %v598 = vld [vmem:[#allocation3] sm:$0xff]
    %v599 = vld [vmem:[#allocation3 + $0x8] sm:$0xff]
    %v600 = vld [vmem:[#allocation3 + $0x10] sm:$0x3]
    %v601 = vld [vmem:[#allocation3 + $0x18] sm:$0xff]
    %v602 = vld [vmem:[#allocation3 + $0x20] sm:$0xff]
    %v603 = vld [vmem:[#allocation3 + $0x28] sm:$0x3]
    %v604 = vsel %vm270, 1, 0
    %v605 = vsel %vm271, 1, 0
    %v606 = vsel %vm272, 1, 0
    %vm607 = vcmp.eq.s32.totalorder %v604, 1
    %vm608 = vcmp.eq.s32.totalorder %v605, 1
    %vm609 = vcmp.eq.s32.totalorder %v606, 1
    %v610 = vsel %vm607, %v598, 0.0
    %v611 = vsel %vm608, %v599, 0.0
    %v612 = vsel %vm609, %v600, 0.0
    %v613 = vsel %vm607, %v601, 0.0
    %v614 = vsel %vm608, %v602, 0.0
    %v615 = vsel %vm609, %v603, 0.0
    %v616 = vld [vmem:[#allocation10] sm:$0xff]
    %v617 = vld [vmem:[#allocation10 + $0x8] sm:$0xff]
    %v618 = vld [vmem:[#allocation10 + $0x10] sm:$0xff]
    %v619 = vld [vmem:[#allocation10 + $0x18] sm:$0xff]
    %v620 = vld [vmem:[#allocation10 + $0x20] sm:$0xff]
    %v621 = vld [vmem:[#allocation10 + $0x28] sm:$0xff]
    %v622 = vld [vmem:[#allocation10 + $0x30] sm:$0xff]
    %v623 = vld [vmem:[#allocation10 + $0x38] sm:$0xff]
    %v624 = vld [vmem:[#allocation10 + $0x40] sm:$0xff]
    %v631 = vrot.slane %v610, 1
    %v632 = vrot.slane %v611, 1
    %v633 = vsel %vm314, %v631, %v632
    %v634 = vrot.slane %v612, 1
    %v635 = vsel %vm314, %v632, %v634
    %v636 = vrot.slane %v613, 1
    %v637 = vrot.slane %v614, 1
    %v638 = vsel %vm314, %v636, %v637
    %v639 = vrot.slane %v615, 1
    %v640 = vsel %vm314, %v637, %v639
    %s641 = scalar_lea.vmem [#allocation10], 72
    %v642 = vld [vmem:[%s641] sm:$0xff]
    %v643 = vld [vmem:[%s641 + $0x8] sm:$0xff]
    %v644 = vld [vmem:[%s641 + $0x10] sm:$0xff]
    %v645 = vld [vmem:[%s641 + $0x18] sm:$0xff]
    %v646 = vld [vmem:[%s641 + $0x20] sm:$0xff]
    %v647 = vld [vmem:[%s641 + $0x28] sm:$0xff]
    %v648 = vld [vmem:[%s641 + $0x30] sm:$0xff]
    %v649 = vld [vmem:[%s641 + $0x38] sm:$0xff]
    %v650 = vld [vmem:[%s641 + $0x40] sm:$0xff]
    %v651 = vsel %vm335, %v633, 0
    %v653 = vsel %vm335, %v635, 0
    %v655 = vsel %vm335, %v638, 0
    %v657 = vsel %vm335, %v640, 0
    %659 = vmatpush.msra.mxu0 0.0
    %660 = vmatpush.msra.mxu0 0.0
    %661 = vmatpush.msra.mxu0 0.0
    %662 = vmatpush.msra.mxu0 0.0
    %663 = vmatpush.msra.mxu0 0.0
    %664 = vmatpush.msra.mxu0 0.0
    %665 = vmatpush.msra.mxu0 0.0
    %666 = vmatpush.msra.mxu0 %v650
    %667 = vmatpush.msra.mxu0 %v649
    %668 = vmatpush.msra.mxu0 %v648
    %669 = vmatpush.msra.mxu0 %v647
    %670 = vmatpush.msra.mxu0 %v646
    %671 = vmatpush.msra.mxu0 %v645
    %672 = vmatpush.msra.mxu0 %v644
    %673 = vmatpush.msra.mxu0 %v643
    %674 = vmatpush.msra.mxu0 %v642
    %675 = vmatmul.f32.gmra.mxu0 %v651
    %v676 = vpop.f32.mrf.mxu0
    %v677 = vadd.f32 0.0, %v676
    %678 = vmatmul.f32.gmra.mxu0 %v653
    %v679 = vpop.f32.mrf.mxu0
    %v680 = vadd.f32 0.0, %v679
    %681 = vmatmul.f32.gmra.mxu0 %v655
    %v682 = vpop.f32.mrf.mxu0
    %v683 = vadd.f32 0.0, %v682
    %684 = vmatmul.f32.gmra.mxu0 %v657
    %v685 = vpop.f32.mrf.mxu0
    %v686 = vadd.f32 0.0, %v685
    %687 = vdwg.mxu0
    %v688 = vsel %vm335, %v610, 0
    %v690 = vsel %vm335, %v611, 0
    %v692 = vsel %vm335, %v613, 0
    %v694 = vsel %vm335, %v614, 0
    %696 = vmatpush.msra.mxu0 0.0
    %697 = vmatpush.msra.mxu0 0.0
    %698 = vmatpush.msra.mxu0 0.0
    %699 = vmatpush.msra.mxu0 0.0
    %700 = vmatpush.msra.mxu0 0.0
    %701 = vmatpush.msra.mxu0 0.0
    %702 = vmatpush.msra.mxu0 0.0
    %703 = vmatpush.msra.mxu0 %v624
    %704 = vmatpush.msra.mxu0 %v623
    %705 = vmatpush.msra.mxu0 %v622
    %706 = vmatpush.msra.mxu0 %v621
    %707 = vmatpush.msra.mxu0 %v620
    %708 = vmatpush.msra.mxu0 %v619
    %709 = vmatpush.msra.mxu0 %v618
    %710 = vmatpush.msra.mxu0 %v617
    %711 = vmatpush.msra.mxu0 %v616
    %712 = vmatmul.f32.gmra.mxu0 %v688
    %v713 = vpop.f32.mrf.mxu0
    %v714 = vadd.f32 %v677, %v713
    %715 = vmatmul.f32.gmra.mxu0 %v690
    %v716 = vpop.f32.mrf.mxu0
    %v717 = vadd.f32 %v680, %v716
    %718 = vmatmul.f32.gmra.mxu0 %v692
    %v719 = vpop.f32.mrf.mxu0
    %v720 = vadd.f32 %v683, %v719
    %721 = vmatmul.f32.gmra.mxu0 %v694
    %v722 = vpop.f32.mrf.mxu0
    %v723 = vadd.f32 %v686, %v722
    %724 = vdwg.mxu0
    %v725 = vrot.slane %v610, 2
    %v726 = vrot.slane %v611, 2
    %v727 = vsel %vm410, %v725, %v726
    %v728 = vrot.slane %v612, 2
    %v729 = vsel %vm410, %v726, %v728
    %v730 = vrot.slane %v613, 2
    %v731 = vrot.slane %v614, 2
    %v732 = vsel %vm410, %v730, %v731
    %v733 = vrot.slane %v615, 2
    %v734 = vsel %vm410, %v731, %v733
    %s735 = scalar_lea.vmem [#allocation10], 144
    %v736 = vld [vmem:[%s735] sm:$0xff]
    %v737 = vld [vmem:[%s735 + $0x8] sm:$0xff]
    %v738 = vld [vmem:[%s735 + $0x10] sm:$0xff]
    %v739 = vld [vmem:[%s735 + $0x18] sm:$0xff]
    %v740 = vld [vmem:[%s735 + $0x20] sm:$0xff]
    %v741 = vld [vmem:[%s735 + $0x28] sm:$0xff]
    %v742 = vld [vmem:[%s735 + $0x30] sm:$0xff]
    %v743 = vld [vmem:[%s735 + $0x38] sm:$0xff]
    %v744 = vld [vmem:[%s735 + $0x40] sm:$0xff]
    %v745 = vsel %vm335, %v727, 0
    %v747 = vsel %vm335, %v729, 0
    %v749 = vsel %vm335, %v732, 0
    %v751 = vsel %vm335, %v734, 0
    %753 = vmatpush.msra.mxu0 0.0
    %754 = vmatpush.msra.mxu0 0.0
    %755 = vmatpush.msra.mxu0 0.0
    %756 = vmatpush.msra.mxu0 0.0
    %757 = vmatpush.msra.mxu0 0.0
    %758 = vmatpush.msra.mxu0 0.0
    %759 = vmatpush.msra.mxu0 0.0
    %760 = vmatpush.msra.mxu0 %v744
    %761 = vmatpush.msra.mxu0 %v743
    %762 = vmatpush.msra.mxu0 %v742
    %763 = vmatpush.msra.mxu0 %v741
    %764 = vmatpush.msra.mxu0 %v740
    %765 = vmatpush.msra.mxu0 %v739
    %766 = vmatpush.msra.mxu0 %v738
    %767 = vmatpush.msra.mxu0 %v737
    %768 = vmatpush.msra.mxu0 %v736
    %769 = vmatmul.f32.gmra.mxu0 %v745
    %v770 = vpop.f32.mrf.mxu0
    %v771 = vadd.f32 0.0, %v770
    %772 = vmatmul.f32.gmra.mxu0 %v747
    %v773 = vpop.f32.mrf.mxu0
    %v774 = vadd.f32 0.0, %v773
    %775 = vmatmul.f32.gmra.mxu0 %v749
    %v776 = vpop.f32.mrf.mxu0
    %v777 = vadd.f32 0.0, %v776
    %778 = vmatmul.f32.gmra.mxu0 %v751
    %v779 = vpop.f32.mrf.mxu0
    %v780 = vadd.f32 0.0, %v779
    %781 = vdwg.mxu0
    %v782 = vadd.f32 %v714, %v771
    %v783 = vadd.f32 %v717, %v774
    %v784 = vadd.f32 %v720, %v777
    %v785 = vadd.f32 %v723, %v780
    %v786 = vadd.f32 %v782, %v783
    %v787 = vadd.f32 %v786, %v784
    %v788 = vadd.f32 %v787, %v785
    %v789 = vrot.slane %v788, 4
    %v790 = vadd.f32 %v788, %v789
    %v791 = vrot.slane %v790, 2
    %v792 = vadd.f32 %v790, %v791
    %v793 = vrot.slane %v792, 1
    %v794 = vadd.f32 %v792, %v793
    %v795 = vld [vmem:[#allocation12] sm:$0xff]
    %v796 = vld [vmem:[#allocation12 + $0x8] sm:$0xff]
    %v797 = vld [vmem:[#allocation12 + $0x10] sm:$0xff]
    %v798 = vld [vmem:[#allocation12 + $0x18] sm:$0xff]
    %v799 = vld [vmem:[#allocation12 + $0x20] sm:$0xff]
    %v800 = vld [vmem:[#allocation12 + $0x28] sm:$0xff]
    %v801 = vld [vmem:[#allocation12 + $0x30] sm:$0xff]
    %v802 = vld [vmem:[#allocation12 + $0x38] sm:$0xff]
    %v803 = vld [vmem:[#allocation12 + $0x40] sm:$0xff]
    %v804 = vld [vmem:[#allocation12 + $0x48] sm:$0xff]
    %v805 = vld [vmem:[#allocation12 + $0x50] sm:$0xff]
    %v806 = vld [vmem:[#allocation12 + $0x58] sm:$0xff]
    %v807 = vld [vmem:[#allocation12 + $0x60] sm:$0xff]
    %v808 = vld [vmem:[#allocation12 + $0x68] sm:$0xff]
    %v809 = vld [vmem:[#allocation12 + $0x70] sm:$0xff]
    %v810 = vld [vmem:[#allocation12 + $0x78] sm:$0xff]
    %811 = vmatpush.msra.mxu0 %v810
    %812 = vmatpush.msra.mxu0 %v809
    %813 = vmatpush.msra.mxu0 %v808
    %814 = vmatpush.msra.mxu0 %v807
    %815 = vmatpush.msra.mxu0 %v806
    %816 = vmatpush.msra.mxu0 %v805
    %817 = vmatpush.msra.mxu0 %v804
    %818 = vmatpush.msra.mxu0 %v803
    %819 = vmatpush.msra.mxu0 %v802
    %820 = vmatpush.msra.mxu0 %v801
    %821 = vmatpush.msra.mxu0 %v800
    %822 = vmatpush.msra.mxu0 %v799
    %823 = vmatpush.msra.mxu0 %v798
    %824 = vmatpush.msra.mxu0 %v797
    %825 = vmatpush.msra.mxu0 %v796
    %826 = vmatpush.msra.mxu0 %v795
    %827 = vmatmul.f32.gmra.mxu0 %v794
    %v828 = vpop.f32.mrf.mxu0
    %v829 = vadd.f32 0.0, %v828
    %830 = vdwg.mxu0
    %v831 = vmul.f32 %v829, 0.001953125
    %v832 = vperm.slane %v831, 0
    %v833 = vsub.f32 %v782, %v832
    %v834 = vsub.f32 %v783, %v832
    %v835 = vsub.f32 %v784, %v832
    %v836 = vsub.f32 %v785, %v832
    %v837 = vmul.f32 %v833, %v833
    %v838 = vmul.f32 %v834, %v834
    %v839 = vmul.f32 %v835, %v835
    %v840 = vmul.f32 %v836, %v836
    %v841 = vadd.f32 %v837, %v838
    %v842 = vadd.f32 %v841, %v839
    %v843 = vadd.f32 %v842, %v840
    %v844 = vrot.slane %v843, 4
    %v845 = vadd.f32 %v843, %v844
    %v846 = vrot.slane %v845, 2
    %v847 = vadd.f32 %v845, %v846
    %v848 = vrot.slane %v847, 1
    %v849 = vadd.f32 %v847, %v848
    %850 = vmatpush.msra.mxu0 %v810
    %851 = vmatpush.msra.mxu0 %v809
    %852 = vmatpush.msra.mxu0 %v808
    %853 = vmatpush.msra.mxu0 %v807
    %854 = vmatpush.msra.mxu0 %v806
    %855 = vmatpush.msra.mxu0 %v805
    %856 = vmatpush.msra.mxu0 %v804
    %857 = vmatpush.msra.mxu0 %v803
    %858 = vmatpush.msra.mxu0 %v802
    %859 = vmatpush.msra.mxu0 %v801
    %860 = vmatpush.msra.mxu0 %v800
    %861 = vmatpush.msra.mxu0 %v799
    %862 = vmatpush.msra.mxu0 %v798
    %863 = vmatpush.msra.mxu0 %v797
    %864 = vmatpush.msra.mxu0 %v796
    %865 = vmatpush.msra.mxu0 %v795
    %866 = vmatmul.f32.gmra.mxu0 %v849
    %v867 = vpop.f32.mrf.mxu0
    %v868 = vadd.f32 0.0, %v867
    %869 = vdwg.mxu0
    %v870 = vmul.f32 %v868, 0.001953125
    %v871 = vld [vmem:[%s6] sm:$0x1]
    %v872 = vadd.f32 %v870, 1e-05
    %v873 = vrsqrt.pop %v872
    %v874 = vmul.f32 %v873, %v872
    %v875 = vmul.f32 %v874, %v873
    %v876 = vmul.f32 0.5, %v875
    %v877 = vsub.f32 1.5, %v876
    %v878 = vmul.f32 %v873, %v877
    %vm879 = vweird.f32 %v872
    %vm880 = vweird.f32 %v873
    %vm881 = vmor %vm879, %vm880
    %v882 = vsel %vm881, %v873, %v878
    %v883 = vmul.f32 %v871, %v882
    %v884 = vld [vmem:[%s6 + $0x1] sm:$0x1]
    %v885 = vmul.f32 %v831, %v883
    %v886 = vsub.f32 %v884, %v885
    %v887 = vperm.slane %v883, 0
    %v888 = vmul.f32 %v782, %v887
    %v889 = vmul.f32 %v783, %v887
    %v890 = vmul.f32 %v784, %v887
    %v891 = vmul.f32 %v785, %v887
    %v892 = vperm.slane %v886, 0
    %v893 = vadd.f32 %v888, %v892
    %v894 = vadd.f32 %v889, %v892
    %v895 = vadd.f32 %v890, %v892
    %v896 = vadd.f32 %v891, %v892
    %897 = vst [vmem:[#allocation13] sm:$0xff] %v893
    %898 = vst [vmem:[#allocation13 + $0x8] sm:$0xff] %v894
    %899 = vst [vmem:[#allocation13 + $0x10] sm:$0xff] %v895
    %900 = vst [vmem:[#allocation13 + $0x18] sm:$0xff] %v896
    // Predicated region
    $region50: #{tpu_custom_call.1} parent=1 // pred_check
      _
    $region51: #{tpu_custom_call.1} parent=1 // pred_check_branch
      %902 = sbr.rel (0) target = $region53
    $region52: #{tpu_custom_call.1} parent=1 // pred_region
      %904 = vsyncadd [#allocation6], 0
      %s905 = sshll.u32 [#allocation13], 4
      %s906 = int_to_ptr.vmem [resolvable:$true] %s905
      %s907 = sshll.u32 %s7, 4
      %s908 = int_to_ptr.hbm [resolvable:$true] %s907
      %913 = dma.vmem_to_hbm [thread:$0]  %s906, 512, %s908, [#allocation6], 128, 128, 8
    $region53: #{tpu_custom_call.1} parent=1 // pred_fallthru
      _
    // Predicated region
    $region54: #{tpu_custom_call.1} parent=1 // pred_check
      _
    $region55: #{tpu_custom_call.1} parent=1 // pred_check_branch
      %915 = sbr.rel (0) target = $region57
    $region56: #{tpu_custom_call.1} parent=1 // pred_region
      %917 = dma.done [#allocation6], 512
    $region57: #{tpu_custom_call.1} parent=1 // pred_fallthru
      _
    %918 = vsyncpa [#allocation5], 1
    %919 = vsyncpa [#allocation8], 1
    %920 = vsyncpa [#allocation11], 1
    %921 = vsyncpa [#allocation6], 1

</llo_original>
